<compile_context>
chip_gen: v5e
topology: v5e:2x2
jax: 0.10.0
libtpu: 0.0.40
codegen_flags: <defaults>
</compile_context>

<pallas_src>
import functools

import jax
import jax.numpy as jnp
from jax import lax
from jax.experimental import pallas as pl
from jax.experimental.pallas import tpu as pltpu


# ----------------------------------------------------------------------------
# Kernels
# ----------------------------------------------------------------------------
def _ln_rowwise_kernel(x_ref, w_ref, b_ref, o_ref, *, eps):
    # x_ref: (tm, C) tile; w_ref/b_ref: (1, C) f32, resident across the grid.
    x = x_ref[...].astype(jnp.float32)
    mu = jnp.mean(x, axis=-1, keepdims=True)
    xc = x - mu
    var = jnp.mean(xc * xc, axis=-1, keepdims=True)          # biased variance
    y = xc * lax.rsqrt(var + eps) * w_ref[...] + b_ref[...]
    o_ref[...] = y.astype(o_ref.dtype)


def _ln_packed_kernel(x_ref, w_ref, b_ref, avg_ref, o_ref, *, eps):
    # Lane-dense path for narrow C: each packed row holds g = P // C original
    # rows side by side (P = g*C = 128 lanes).
    # avg_ref: (P, P) block-diagonal matrix with avg[l, m] = 1/C when lanes
    # l, m belong to the same original row's segment, else 0.  `x @ avg`
    # therefore computes each segment's mean and broadcasts it back over its
    # own C lanes in one MXU pass (free slot; HIGHEST precision => f32 exact).
    x = x_ref[...].astype(jnp.float32)                        # (tm, P)
    avg = avg_ref[...]                                        # (P, P) f32
    mu = jnp.dot(x, avg, precision=lax.Precision.HIGHEST,
                 preferred_element_type=jnp.float32)          # (tm, P)
    xc = x - mu
    var = jnp.dot(xc * xc, avg, precision=lax.Precision.HIGHEST,
                  preferred_element_type=jnp.float32)         # biased variance
    y = xc * lax.rsqrt(var + eps) * w_ref[...] + b_ref[...]
    o_ref[...] = y.astype(o_ref.dtype)


# ----------------------------------------------------------------------------
# Tiling helpers
# ----------------------------------------------------------------------------
def _vmem_budget_bytes():
    """<= half of physical VMEM, capped at 64 MiB (v5e/v6e: 128 MiB, v7x: 64 MiB)."""
    cap = 64 * 1024 * 1024  # conservative default if the query fails
    try:
        cap = int(pltpu.get_tpu_info().vmem_capacity_bytes)
    except Exception:
        pass
    return min(cap // 2, 64 * 1024 * 1024)


def _pick_block_rows(n_rows, row_bytes, target_block_bytes, *, min_grid=2):
    """Row tile: multiple of 8 (sublanes) unless it covers the whole array."""
    if n_rows <= 8:
        return n_rows                                   # full dim: always legal
    tm = max(8, int(target_block_bytes) // max(1, int(row_bytes)))
    cap = max(8, -(-n_rows // max(1, int(min_grid))))   # keep >= min_grid steps
    tm = min(tm, cap, n_rows)
    return max(8, (tm // 8) * 8)


# ----------------------------------------------------------------------------
# Wrapper
# ----------------------------------------------------------------------------
def with_bias_layernorm(x, weight, bias, *, eps=1e-5, block_rows=None,
                        pack_lanes=True):
    """x: (..., C); weight, bias: (C,). Returns same shape/dtype as x."""
    orig_shape = x.shape
    C = int(orig_shape[-1])
    assert weight.shape == (C,) and bias.shape == (C,)

    x2 = x.reshape(-1, C)
    M = int(x2.shape[0])

    w32 = weight.astype(jnp.float32)
    b32 = bias.astype(jnp.float32)

    # Lane-dense packing for narrow last dims: (M, C) -> (M/g, g*C) is a free
    # (contiguous) reshape; g*C = 128 makes every load/store fully lane-dense.
    g = 1
    if pack_lanes and C < 128 and 128 % C == 0 and M % (128 // C) == 0:
        g = 128 // C
    P = g * C
    Mp = M // g
    xp = x2.reshape(Mp, P)

    budget = _vmem_budget_bytes()
    if block_rows is None:
        target_block = max(512 * 1024, min(budget // 16, 4 * 1024 * 1024))
        tm = _pick_block_rows(Mp, P * 4, target_block)
    else:
        tm = _pick_block_rows(Mp, 1, int(block_rows), min_grid=1)

    grid = (pl.cdiv(Mp, tm),)   # ragged last block is padded/masked by Pallas
    out_shape = jax.ShapeDtypeStruct((Mp, P), x.dtype)
    out_spec = pl.BlockSpec((tm, P), lambda i: (i, 0))
    compiler_params = pltpu.CompilerParams(
        dimension_semantics=("parallel",),
        vmem_limit_bytes=int(budget),
    )

    if g == 1:
        kernel = functools.partial(_ln_rowwise_kernel, eps=float(eps))
        in_specs = [
            pl.BlockSpec((tm, P), lambda i: (i, 0)),
            pl.BlockSpec((1, P), lambda i: (0, 0)),
            pl.BlockSpec((1, P), lambda i: (0, 0)),
        ]
        args = (xp, w32.reshape(1, P), b32.reshape(1, P))
    else:
        lane = jnp.arange(P, dtype=jnp.int32)
        same_seg = (lane[:, None] // C) == (lane[None, :] // C)
        avg = same_seg.astype(jnp.float32) / jnp.float32(C)   # (P, P)
        w_p = jnp.tile(w32, g).reshape(1, P)
        b_p = jnp.tile(b32, g).reshape(1, P)
        kernel = functools.partial(_ln_packed_kernel, eps=float(eps))
        in_specs = [
            pl.BlockSpec((tm, P), lambda i: (i, 0)),
            pl.BlockSpec((1, P), lambda i: (0, 0)),
            pl.BlockSpec((1, P), lambda i: (0, 0)),
            pl.BlockSpec((P, P), lambda i: (0, 0)),
        ]
        args = (xp, w_p, b_p, avg)

    out = pl.pallas_call(
        kernel,
        out_shape=out_shape,
        grid_spec=pltpu.PrefetchScalarGridSpec(
            num_scalar_prefetch=0,
            grid=grid,
            in_specs=in_specs,
            out_specs=out_spec,
        ),
        compiler_params=compiler_params,
    )(*args)
    return out.reshape(orig_shape)


# ----------------------------------------------------------------------------
# Reference & self-test
# ----------------------------------------------------------------------------
def _reference(x, weight, bias, eps=1e-5):
    xf = x.astype(jnp.float32)
    mu = jnp.mean(xf, axis=-1, keepdims=True)
    var = jnp.mean((xf - mu) ** 2, axis=-1, keepdims=True)
    return ((xf - mu) / jnp.sqrt(var + eps) * weight + bias).astype(x.dtype)


if __name__ == "__main__":
    key = jax.random.PRNGKey(0)
    k1, k2, k3, k4, k5, k6, k7 = jax.random.split(key, 7)

    # Case 1: narrow channels (lane-packed path), e.g. 2 x (8x8) tokens, C=32.
    B, N, C = 2, 64, 32
    x = jax.random.normal(k1, (B, N, C), dtype=jnp.float32)
    w = jnp.ones((C,), jnp.float32) + 0.1 * jax.random.normal(k2, (C,), jnp.float32)
    b = 0.1 * jax.random.normal(k3, (C,), jnp.float32)
    y = jax.block_until_ready(with_bias_layernorm(x, w, b))
    assert y.shape == x.shape and y.dtype == x.dtype
    assert jnp.allclose(y, _reference(x, w, b), atol=2e-5, rtol=2e-5), "case 1 mismatch"

    # Case 2: wide channels + row count not divisible by the tile
    # (row-wise kernel, cdiv grid with padded/masked last block).
    B2, N2, C2 = 3, 10, 256
    x2 = jax.random.normal(k4, (B2, N2, C2), dtype=jnp.float32)
    w2 = jnp.ones((C2,), jnp.float32) + 0.1 * jax.random.normal(k5, (C2,), jnp.float32)
    b2 = 0.1 * jax.random.normal(k6, (C2,), jnp.float32)
    y2 = jax.block_until_ready(with_bias_layernorm(x2, w2, b2))
    assert jnp.allclose(y2, _reference(x2, w2, b2), atol=2e-5, rtol=2e-5), "case 2 mismatch"

    # Case 3: lane-packed path with a ragged packed-row count (padded last block).
    B3, N3, C3 = 2, 50, 32
    x3 = jax.random.normal(k7, (B3, N3, C3), dtype=jnp.float32)
    y3 = jax.block_until_ready(with_bias_layernorm(x3, w, b))
    assert jnp.allclose(y3, _reference(x3, w, b), atol=2e-5, rtol=2e-5), "case 3 mismatch"

    print("KERNEL_OK")
</pallas_src>

<mosaic_0001>
module attributes {stable_mosaic.version = 11 : i64} {
  func.func @_ln_packed_kernel(%arg0: i32, %arg1: memref<16x128xf32, #tpu.memory_space<vmem>>, %arg2: memref<1x128xf32, #tpu.memory_space<vmem>>, %arg3: memref<1x128xf32, #tpu.memory_space<vmem>>, %arg4: memref<128x128xf32, #tpu.memory_space<vmem>>, %arg5: memref<16x128xf32, #tpu.memory_space<vmem>>) attributes {dimension_semantics = [#tpu.dimension_semantics<parallel>], iteration_bounds = array<i64: 2>, scalar_prefetch = 0 : i64, scratch_operands = 0 : i64, tpu.core_type = #tpu.core_type<tc>, window_params = [{transform_indices = @transform_0, window_bounds = array<i64: 16, 128>}, {pipeline_mode = #tpu.pipeline_mode<synchronous>, transform_indices = @transform_1, window_bounds = array<i64: 1, 128>}, {pipeline_mode = #tpu.pipeline_mode<synchronous>, transform_indices = @transform_2, window_bounds = array<i64: 1, 128>}, {pipeline_mode = #tpu.pipeline_mode<synchronous>, transform_indices = @transform_3, window_bounds = array<i64: 128, 128>}, {transform_indices = @transform_4, window_bounds = array<i64: 16, 128>}]} {
    %c0 = arith.constant 0 : index
    %c0_0 = arith.constant 0 : index
    %0 = vector.load %arg1[%c0, %c0_0] : memref<16x128xf32, #tpu.memory_space<vmem>>, vector<16x128xf32>
    %c0_1 = arith.constant 0 : index
    %c0_2 = arith.constant 0 : index
    %1 = vector.load %arg4[%c0_1, %c0_2] : memref<128x128xf32, #tpu.memory_space<vmem>>, vector<128x128xf32>
    %cst = arith.constant dense<0.000000e+00> : vector<16x128xf32>
    %2 = tpu.matmul %0, %1, %cst {dimension_numbers = #tpu.dot_dimension_numbers<[1], [0], [0], [1], [0, 0, 1, 1], [], []>, precision = #tpu.contract_precision<fp32>} : vector<16x128xf32>, vector<128x128xf32>, vector<16x128xf32> -> vector<16x128xf32>
    %3 = arith.subf %0, %2 : vector<16x128xf32>
    %4 = arith.mulf %3, %3 : vector<16x128xf32>
    %cst_3 = arith.constant dense<0.000000e+00> : vector<16x128xf32>
    %5 = tpu.matmul %4, %1, %cst_3 {dimension_numbers = #tpu.dot_dimension_numbers<[1], [0], [0], [1], [0, 0, 1, 1], [], []>, precision = #tpu.contract_precision<fp32>} : vector<16x128xf32>, vector<128x128xf32>, vector<16x128xf32> -> vector<16x128xf32>
    %cst_4 = arith.constant 9.99999974E-6 : f32
    %6 = vector.broadcast %cst_4 : f32 to vector<16x128xf32>
    %7 = arith.addf %5, %6 : vector<16x128xf32>
    %8 = math.rsqrt %7 : vector<16x128xf32>
    %9 = arith.mulf %3, %8 : vector<16x128xf32>
    %c0_5 = arith.constant 0 : index
    %c0_6 = arith.constant 0 : index
    %10 = vector.load %arg2[%c0_5, %c0_6] : memref<1x128xf32, #tpu.memory_space<vmem>>, vector<1x128xf32>
    %11 = vector.broadcast %10 : vector<1x128xf32> to vector<16x128xf32>
    %12 = arith.mulf %9, %11 : vector<16x128xf32>
    %c0_7 = arith.constant 0 : index
    %c0_8 = arith.constant 0 : index
    %13 = vector.load %arg3[%c0_7, %c0_8] : memref<1x128xf32, #tpu.memory_space<vmem>>, vector<1x128xf32>
    %14 = vector.broadcast %13 : vector<1x128xf32> to vector<16x128xf32>
    %15 = arith.addf %12, %14 : vector<16x128xf32>
    %c0_9 = arith.constant 0 : index
    %c0_10 = arith.constant 0 : index
    %16 = vector.load %arg5[%c0_9, %c0_10] : memref<16x128xf32, #tpu.memory_space<vmem>>, vector<16x128xf32>
    tpu.vector_store %arg5[%c0_9, %c0_10], %15 {strides = array<i32>} : memref<16x128xf32, #tpu.memory_space<vmem>>, vector<16x128xf32>,
    return
  }
  func.func @transform_0(%arg0: i32) -> (i32, i32) {
    %c0_i32 = arith.constant 0 : i32
    %c0_i32_0 = arith.constant 0 : i32
    return %arg0, %c0_i32 : i32, i32
  }
  func.func @transform_1(%arg0: i32) -> (i32, i32) {
    %c0_i32 = arith.constant 0 : i32
    %c0_i32_0 = arith.constant 0 : i32
    %c0_i32_1 = arith.constant 0 : i32
    return %c0_i32, %c0_i32_0 : i32, i32
  }
  func.func @transform_2(%arg0: i32) -> (i32, i32) {
    %c0_i32 = arith.constant 0 : i32
    %c0_i32_0 = arith.constant 0 : i32
    %c0_i32_1 = arith.constant 0 : i32
    return %c0_i32, %c0_i32_0 : i32, i32
  }
  func.func @transform_3(%arg0: i32) -> (i32, i32) {
    %c0_i32 = arith.constant 0 : i32
    %c0_i32_0 = arith.constant 0 : i32
    %c0_i32_1 = arith.constant 0 : i32
    return %c0_i32, %c0_i32_0 : i32, i32
  }
  func.func @transform_4(%arg0: i32) -> (i32, i32) {
    %c0_i32 = arith.constant 0 : i32
    %c0_i32_0 = arith.constant 0 : i32
    return %arg0, %c0_i32 : i32, i32
  }
}

</mosaic_0001>

<llo_original>
// kernel: tpu_custom_call.1
$region0: #{tpu_custom_call.1}
  #allocation0 [shape = 'u32[]', space=smem, size = 0x4, offset = 0x4, fixed_abs, tag = 'smem constant byte address 0x4 - core index']
  #allocation1 [shape = 'u32[72,128]{1,0:T(1,128)}', space=vmem, size = 0x9000, scoped, tag = 'internal scratch']
  %s0 = inlined_call_operand.hbm [shape: f32[32,128], index: 0, kind: input, shape index: {}]
  %s1 = inlined_call_operand.hbm [shape: f32[1,128], index: 1, kind: input, shape index: {}]
  %s2 = inlined_call_operand.vmem [shape: f32[1,128], index: 2, kind: input, shape index: {}]
  %s3 = inlined_call_operand.hbm [shape: f32[128,128], index: 3, kind: input, shape index: {}]
  %s4 = inlined_call_operand.hbm [shape: f32[32,128], index: 4, kind: output, shape index: {}]
  %s5 = sld [smem:[#allocation0]]
  $region61: #{tpu_custom_call.1} parent=0
    _
  %s7 = ssub.s32 1, %s5
  %s8 = scalar_select 0, %s7, %s5
  $region1: #{tpu_custom_call.1} parent=0
    #allocation2 [shape = 'u8[16384]{0}', space=vmem, size = 0x4000, scoped, tag = 'input window, operand 0']
    #allocation3 [shape = 's32[2]{0}', space=sflag, size = 0x8, scoped, tag = 'scoped memory for tpu_custom_call.1']
    #allocation4 [shape = 's32[2]{0}', space=sflag, size = 0x8, scoped, tag = 'scoped memory for tpu_custom_call.1']
    #allocation5 [shape = 'u8[512]{0}', space=vmem, size = 0x400, scoped, tag = 'input window, operand 1, single buffered']
    #allocation6 [shape = 's32[1]{0}', space=sflag, size = 0x4, scoped, tag = 'scoped memory for tpu_custom_call.1']
    #allocation7 [shape = 'u8[65536]{0}', space=vmem, size = 0x10000, scoped, tag = 'input window, operand 3, single buffered']
    #allocation8 [shape = 'u8[16384]{0}', space=vmem, size = 0x4000, scoped, tag = 'output window, operand 0']
    %9 = vsyncpa [#allocation3], 0
    %s10 = scalar_lea.sflag [#allocation3], 1
    %11 = vsyncpa %s10, 0
    %12 = vsyncpa [#allocation6], 0
    %13 = vsyncpa [#allocation4], 0
    %s14 = scalar_lea.sflag [#allocation4], 1
    %15 = vsyncpa %s14, 0
    loop: start=0, step=1, limit=4
    $region2: #{tpu_custom_call.1} parent=1 // loop_pre_header
      _
    $region3: #{tpu_custom_call.1} parent=1 // loop_header
      %s17 = sphi 0, %s21
      %p18 = scmp.ge.s32.totalorder %s17, 4
      %s27 = sphi 0, %s29
      %s30 = sphi 0, %s27
      %s31 = sphi 0, %s30
      %s47 = sphi 0, %s31
      %s51 = sphi 0, %s51
      %s53 = sphi 0, %s51
      %s54 = sphi 0, %s53
      %s68 = sphi 0, %s54
      %s72 = sphi 0, %s72
      %s74 = sphi 0, %s72
      %s75 = sphi 0, %s74
      %s89 = sphi 0, %s75
      %s93 = sphi 0, %s93
      %s95 = sphi 0, %s93
      %s96 = sphi 0, %s95
      %s110 = sphi 0, %s96
      %s116 = sphi 0, %s118
      %s119 = sphi 0, %s116
      %s120 = sphi 0, %s119
      %s136 = sphi 0, %s120
    $region4: #{tpu_custom_call.1} parent=1 // loop_header_branch
      %20 = sbr.rel (%p18) target = $region8
    $region5: #{tpu_custom_call.1} parent=1 // loop_body
      %s22 = ssub.s32 %s17, 1
      %s23 = ssub.s32 %s17, 2
      %s24 = sadd.s32 %s17, 1
      %s25 = ssub.s32 %s17, %s24
      %p26 = scmp.eq.s32.totalorder %s25, 0
      %s28 = sadd.s32 %s27, 1
      %s29 = scalar_select %p26, %s27, %s28
      %p32 = pneg %p26
      %p33 = scmp.eq.s32.totalorder %s17, 1
      %p34 = por %p32, %p33
      %p35 = scmp.ne.s32.totalorder %s27, %s30
      %p36 = scmp.eq.s32.totalorder %s17, 0
      %p37 = por %p35, %p36
      %p38 = scmp.ne.s32.totalorder %s27, %s30
      %p39 = scmp.eq.s32.totalorder %s22, 1
      %p40 = por %p38, %p39
      %p41 = scmp.ne.s32.totalorder %s30, %s31
      %p42 = scmp.eq.s32.totalorder %s22, 0
      %p43 = por %p41, %p42
      %p44 = scmp.ne.s32.totalorder %s30, %s31
      %p45 = scmp.eq.s32.totalorder %s23, 1
      %p46 = por %p44, %p45
      %p48 = scmp.ne.s32.totalorder %s31, %s47
      %p49 = scmp.eq.s32.totalorder %s23, 0
      %p50 = por %p48, %p49
      %s52 = sadd.s32 %s51, 1
      %p55 = scmp.eq.s32.totalorder %s17, 1
      %p56 = scmp.ne.s32.totalorder %s51, %s53
      %p57 = scmp.eq.s32.totalorder %s17, 0
      %p58 = por %p56, %p57
      %p59 = scmp.ne.s32.totalorder %s51, %s53
      %p60 = scmp.eq.s32.totalorder %s22, 1
      %p61 = por %p59, %p60
      %p62 = scmp.ne.s32.totalorder %s53, %s54
      %p63 = scmp.eq.s32.totalorder %s22, 0
      %p64 = por %p62, %p63
      %p65 = scmp.ne.s32.totalorder %s53, %s54
      %p66 = scmp.eq.s32.totalorder %s23, 1
      %p67 = por %p65, %p66
      %p69 = scmp.ne.s32.totalorder %s54, %s68
      %p70 = scmp.eq.s32.totalorder %s23, 0
      %p71 = por %p69, %p70
      %s73 = sadd.s32 %s72, 1
      %p76 = scmp.eq.s32.totalorder %s17, 1
      %p77 = scmp.ne.s32.totalorder %s72, %s74
      %p78 = scmp.eq.s32.totalorder %s17, 0
      %p79 = por %p77, %p78
      %p80 = scmp.ne.s32.totalorder %s72, %s74
      %p81 = scmp.eq.s32.totalorder %s22, 1
      %p82 = por %p80, %p81
      %p83 = scmp.ne.s32.totalorder %s74, %s75
      %p84 = scmp.eq.s32.totalorder %s22, 0
      %p85 = por %p83, %p84
      %p86 = scmp.ne.s32.totalorder %s74, %s75
      %p87 = scmp.eq.s32.totalorder %s23, 1
      %p88 = por %p86, %p87
      %p90 = scmp.ne.s32.totalorder %s75, %s89
      %p91 = scmp.eq.s32.totalorder %s23, 0
      %p92 = por %p90, %p91
      %s94 = sadd.s32 %s93, 1
      %p97 = scmp.eq.s32.totalorder %s17, 1
      %p98 = scmp.ne.s32.totalorder %s93, %s95
      %p99 = scmp.eq.s32.totalorder %s17, 0
      %p100 = por %p98, %p99
      %p101 = scmp.ne.s32.totalorder %s93, %s95
      %p102 = scmp.eq.s32.totalorder %s22, 1
      %p103 = por %p101, %p102
      %p104 = scmp.ne.s32.totalorder %s95, %s96
      %p105 = scmp.eq.s32.totalorder %s22, 0
      %p106 = por %p104, %p105
      %p107 = scmp.ne.s32.totalorder %s95, %s96
      %p108 = scmp.eq.s32.totalorder %s23, 1
      %p109 = por %p107, %p108
      %p111 = scmp.ne.s32.totalorder %s96, %s110
      %p112 = scmp.eq.s32.totalorder %s23, 0
      %p113 = por %p111, %p112
      %s114 = ssub.s32 %s17, %s24
      %p115 = scmp.eq.s32.totalorder %s114, 0
      %s117 = sadd.s32 %s116, 1
      %s118 = scalar_select %p115, %s116, %s117
      %p121 = pneg %p115
      %p122 = scmp.eq.s32.totalorder %s17, 1
      %p123 = por %p121, %p122
      %p124 = scmp.ne.s32.totalorder %s116, %s119
      %p125 = scmp.eq.s32.totalorder %s17, 0
      %p126 = por %p124, %p125
      %p127 = scmp.ne.s32.totalorder %s116, %s119
      %p128 = scmp.eq.s32.totalorder %s22, 1
      %p129 = por %p127, %p128
      %p130 = scmp.ne.s32.totalorder %s119, %s120
      %p131 = scmp.eq.s32.totalorder %s22, 0
      %p132 = por %p130, %p131
      %p133 = scmp.ne.s32.totalorder %s119, %s120
      %p134 = scmp.eq.s32.totalorder %s23, 1
      %p135 = por %p133, %p134
      %p137 = scmp.ne.s32.totalorder %s120, %s136
      %p138 = scmp.eq.s32.totalorder %s23, 0
      %p139 = por %p137, %p138
      %p140 = scmp.le.s32.totalorder 1, %s17
      %p141 = scmp.lt.s32.totalorder %s17, 3
      %p142 = pnand %p140, %p141
      %p143 = pneg %p142
      // Predicated region
      $region9: #{tpu_custom_call.1} parent=5 // pred_check
        _
      $region10: #{tpu_custom_call.1} parent=5 // pred_check_branch
        %145 = sbr.rel (%p142) target = $region12
      $region11: #{tpu_custom_call.1} parent=5 // pred_region
        %s146 = ssub.s32 %s17, 1
        // Predicated region
        $region13: #{tpu_custom_call.1} parent=11 // pred_check
          %p147 = pneg %p64
        $region14: #{tpu_custom_call.1} parent=11 // pred_check_branch
          %149 = sbr.rel (%p147) target = $region16
        $region15: #{tpu_custom_call.1} parent=11 // pred_region
          %151 = vsyncadd [#allocation6], 0
          %s153 = sshll.u32 %s1, 4
          %s154 = int_to_ptr.hbm [resolvable:$true] %s153
          %s155 = sshll.u32 [#allocation5], 4
          %s156 = int_to_ptr.vmem [resolvable:$true] %s155
          %158 = dma.hbm_to_vmem [thread:$0]  %s154, 16, %s156, [#allocation6]
        $region16: #{tpu_custom_call.1} parent=11 // pred_fallthru
          _
        // Predicated region
        $region17: #{tpu_custom_call.1} parent=11 // pred_check
          %p159 = pneg %p85
        $region18: #{tpu_custom_call.1} parent=11 // pred_check_branch
          %161 = sbr.rel (%p159) target = $region20
        $region19: #{tpu_custom_call.1} parent=11 // pred_region
          _
        $region20: #{tpu_custom_call.1} parent=11 // pred_fallthru
          _
        // Predicated region
        $region21: #{tpu_custom_call.1} parent=11 // pred_check
          %p162 = pneg %p106
        $region22: #{tpu_custom_call.1} parent=11 // pred_check_branch
          %164 = sbr.rel (%p162) target = $region24
        $region23: #{tpu_custom_call.1} parent=11 // pred_region
          %166 = vsyncadd [#allocation6], 0
          %s167 = sshll.u32 %s3, 4
          %s168 = int_to_ptr.hbm [resolvable:$true] %s167
          %s169 = sshll.u32 [#allocation7], 4
          %s170 = int_to_ptr.vmem [resolvable:$true] %s169
          %175 = dma.hbm_to_vmem [thread:$0]  %s168, 2048, %s170, [#allocation6], 128, 128, 8
        $region24: #{tpu_custom_call.1} parent=11 // pred_fallthru
          _
      $region12: #{tpu_custom_call.1} parent=5 // pred_fallthru
        _
      %p176 = scmp.lt.s32.totalorder %s17, 2
      // Predicated region
      $region25: #{tpu_custom_call.1} parent=5 // pred_check
        %p177 = pneg %p176
      $region26: #{tpu_custom_call.1} parent=5 // pred_check_branch
        %179 = sbr.rel (%p177) target = $region28
      $region27: #{tpu_custom_call.1} parent=5 // pred_region
        // Predicated region
        $region29: #{tpu_custom_call.1} parent=27 // pred_check
          %p180 = pneg %p37
        $region30: #{tpu_custom_call.1} parent=27 // pred_check_branch
          %182 = sbr.rel (%p180) target = $region32
        $region31: #{tpu_custom_call.1} parent=27 // pred_region
          %s183 = sand.u32 %s27, 1
          %s184 = scalar_lea.sflag [#allocation3], %s183
          %s185 = sand.u32 %s27, 1
          %s186 = smul.addr %s185, 16
          %s187 = scalar_lea.vmem [#allocation2], %s186
          %s188 = smul.u32 2, %s17
          %190 = vsyncadd %s184, 0
          %s191 = smul.addr %s188, 8
          %s192 = scalar_lea.hbm %s0, %s191
          %s193 = sshll.u32 %s192, 4
          %s194 = int_to_ptr.hbm [resolvable:$true] %s193
          %s195 = sshll.u32 %s187, 4
          %s196 = int_to_ptr.vmem [resolvable:$true] %s195
          %201 = dma.hbm_to_vmem [thread:$0]  %s194, 256, %s196, %s184, 128, 128, 8
        $region32: #{tpu_custom_call.1} parent=27 // pred_fallthru
          _
      $region28: #{tpu_custom_call.1} parent=5 // pred_fallthru
        _
      %p202 = scmp.le.s32.totalorder 1, %s17
      %p203 = scmp.lt.s32.totalorder %s17, 3
      %p204 = pnand %p202, %p203
      %p205 = pneg %p204
      // Predicated region
      $region33: #{tpu_custom_call.1} parent=5 // pred_check
        _
      $region34: #{tpu_custom_call.1} parent=5 // pred_check_branch
        %207 = sbr.rel (%p204) target = $region36
      $region35: #{tpu_custom_call.1} parent=5 // pred_region
        %s208 = ssub.s32 %s17, 1
        %s209 = sand.u32 %s30, 1
        %s210 = scalar_lea.sflag [#allocation3], %s209
        %s211 = sand.u32 %s30, 1
        %s212 = smul.addr %s211, 16
        %s213 = scalar_lea.vmem [#allocation2], %s212
        // Predicated region
        $region37: #{tpu_custom_call.1} parent=35 // pred_check
          %p214 = pneg %p43
        $region38: #{tpu_custom_call.1} parent=35 // pred_check_branch
          %216 = sbr.rel (%p214) target = $region40
        $region39: #{tpu_custom_call.1} parent=35 // pred_region
          %218 = dma.done %s210, 256
        $region40: #{tpu_custom_call.1} parent=35 // pred_fallthru
          _
        // Predicated region
        $region41: #{tpu_custom_call.1} parent=35 // pred_check
          %p219 = pneg %p64
        $region42: #{tpu_custom_call.1} parent=35 // pred_check_branch
          %221 = sbr.rel (%p219) target = $region44
        $region43: #{tpu_custom_call.1} parent=35 // pred_region
          %223 = dma.done [#allocation6], 16
        $region44: #{tpu_custom_call.1} parent=35 // pred_fallthru
          _
        // Predicated region
        $region45: #{tpu_custom_call.1} parent=35 // pred_check
          %p224 = pneg %p106
        $region46: #{tpu_custom_call.1} parent=35 // pred_check_branch
          %226 = sbr.rel (%p224) target = $region48
        $region47: #{tpu_custom_call.1} parent=35 // pred_region
          %228 = dma.done [#allocation6], 2048
        $region48: #{tpu_custom_call.1} parent=35 // pred_fallthru
          _
        %s229 = sand.u32 %s30, 1
        %s230 = scalar_lea.sflag [#allocation3], %s229
        %s231 = sand.u32 %s30, 1
        %s232 = smul.addr %s231, 16
        %s233 = scalar_lea.vmem [#allocation2], %s232
        %p234 = pneg %p43
        %p235 = pneg %p40
        %p236 = pneg %p64
        %p237 = pneg %p61
        %p238 = pneg %p85
        %p239 = pneg %p82
        %p240 = pneg %p106
        %p241 = pneg %p103
        %p242 = pneg %p132
        %p243 = pneg %p129
        %s244 = sand.u32 %s119, 1
        %s245 = scalar_lea.sflag [#allocation4], %s244
        %s246 = sand.u32 %s119, 1
        %s247 = smul.addr %s246, 16
        %s248 = scalar_lea.vmem [#allocation8], %s247
        %s249 = smul.u32 2, %s22
        %s250 = smul.u32 2, %s22
        %v251 = vld [vmem:[%s213] sm:$0xff]
        %v252 = vld [vmem:[%s213 + $0x8] sm:$0xff]
        %v253 = vld [vmem:[#allocation7] sm:$0xff]
        %v254 = vld [vmem:[#allocation7 + $0x8] sm:$0xff]
        %v255 = vld [vmem:[#allocation7 + $0x10] sm:$0xff]
        %v256 = vld [vmem:[#allocation7 + $0x18] sm:$0xff]
        %v257 = vld [vmem:[#allocation7 + $0x20] sm:$0xff]
        %v258 = vld [vmem:[#allocation7 + $0x28] sm:$0xff]
        %v259 = vld [vmem:[#allocation7 + $0x30] sm:$0xff]
        %v260 = vld [vmem:[#allocation7 + $0x38] sm:$0xff]
        %v261 = vld [vmem:[#allocation7 + $0x40] sm:$0xff]
        %v262 = vld [vmem:[#allocation7 + $0x48] sm:$0xff]
        %v263 = vld [vmem:[#allocation7 + $0x50] sm:$0xff]
        %v264 = vld [vmem:[#allocation7 + $0x58] sm:$0xff]
        %v265 = vld [vmem:[#allocation7 + $0x60] sm:$0xff]
        %v266 = vld [vmem:[#allocation7 + $0x68] sm:$0xff]
        %v267 = vld [vmem:[#allocation7 + $0x70] sm:$0xff]
        %v268 = vld [vmem:[#allocation7 + $0x78] sm:$0xff]
        %v269 = vand.u32 %v268, 4294901760
        %270 = vmatpush.msra.mxu0 %v269
        %v271 = vand.u32 %v267, 4294901760
        %272 = vmatpush.msra.mxu0 %v271
        %v273 = vand.u32 %v266, 4294901760
        %274 = vmatpush.msra.mxu0 %v273
        %v275 = vand.u32 %v265, 4294901760
        %276 = vmatpush.msra.mxu0 %v275
        %v277 = vand.u32 %v264, 4294901760
        %278 = vmatpush.msra.mxu0 %v277
        %v279 = vand.u32 %v263, 4294901760
        %280 = vmatpush.msra.mxu0 %v279
        %v281 = vand.u32 %v262, 4294901760
        %282 = vmatpush.msra.mxu0 %v281
        %v283 = vand.u32 %v261, 4294901760
        %284 = vmatpush.msra.mxu0 %v283
        %v285 = vand.u32 %v260, 4294901760
        %286 = vmatpush.msra.mxu0 %v285
        %v287 = vand.u32 %v259, 4294901760
        %288 = vmatpush.msra.mxu0 %v287
        %v289 = vand.u32 %v258, 4294901760
        %290 = vmatpush.msra.mxu0 %v289
        %v291 = vand.u32 %v257, 4294901760
        %292 = vmatpush.msra.mxu0 %v291
        %v293 = vand.u32 %v256, 4294901760
        %294 = vmatpush.msra.mxu0 %v293
        %v295 = vand.u32 %v255, 4294901760
        %296 = vmatpush.msra.mxu0 %v295
        %v297 = vand.u32 %v254, 4294901760
        %298 = vmatpush.msra.mxu0 %v297
        %v299 = vand.u32 %v253, 4294901760
        %300 = vmatpush.msra.mxu0 %v299
        %v301 = vand.u32 %v251, 4294901760
        %v302 = vsub.f32 %v251, %v301
        %v303 = vand.u32 %v302, 4294901760
        %v304 = vsub.f32 %v302, %v303
        %v305 = vand.u32 %v304, 4294901760
        %306 = vmatmul.f32.gmra.mxu0 %v305
        %v307 = vpop.f32.mrf.mxu0
        %v308 = vadd.f32 0.0, %v307
        %v309 = vand.u32 %v252, 4294901760
        %v310 = vsub.f32 %v252, %v309
        %v311 = vand.u32 %v310, 4294901760
        %v312 = vsub.f32 %v310, %v311
        %v313 = vand.u32 %v312, 4294901760
        %314 = vmatmul.f32.gmra.mxu0 %v313
        %v315 = vpop.f32.mrf.mxu0
        %v316 = vadd.f32 0.0, %v315
        %317 = vdwg.mxu0
        %v318 = vand.u32 %v268, 4294901760
        %v319 = vsub.f32 %v268, %v318
        %v320 = vand.u32 %v319, 4294901760
        %v321 = vsub.f32 %v319, %v320
        %v322 = vand.u32 %v321, 4294901760
        %323 = vmatpush.msra.mxu0 %v322
        %v324 = vand.u32 %v267, 4294901760
        %v325 = vsub.f32 %v267, %v324
        %v326 = vand.u32 %v325, 4294901760
        %v327 = vsub.f32 %v325, %v326
        %v328 = vand.u32 %v327, 4294901760
        %329 = vmatpush.msra.mxu0 %v328
        %v330 = vand.u32 %v266, 4294901760
        %v331 = vsub.f32 %v266, %v330
        %v332 = vand.u32 %v331, 4294901760
        %v333 = vsub.f32 %v331, %v332
        %v334 = vand.u32 %v333, 4294901760
        %335 = vmatpush.msra.mxu0 %v334
        %v336 = vand.u32 %v265, 4294901760
        %v337 = vsub.f32 %v265, %v336
        %v338 = vand.u32 %v337, 4294901760
        %v339 = vsub.f32 %v337, %v338
        %v340 = vand.u32 %v339, 4294901760
        %341 = vmatpush.msra.mxu0 %v340
        %v342 = vand.u32 %v264, 4294901760
        %v343 = vsub.f32 %v264, %v342
        %v344 = vand.u32 %v343, 4294901760
        %v345 = vsub.f32 %v343, %v344
        %v346 = vand.u32 %v345, 4294901760
        %347 = vmatpush.msra.mxu0 %v346
        %v348 = vand.u32 %v263, 4294901760
        %v349 = vsub.f32 %v263, %v348
        %v350 = vand.u32 %v349, 4294901760
        %v351 = vsub.f32 %v349, %v350
        %v352 = vand.u32 %v351, 4294901760
        %353 = vmatpush.msra.mxu0 %v352
        %v354 = vand.u32 %v262, 4294901760
        %v355 = vsub.f32 %v262, %v354
        %v356 = vand.u32 %v355, 4294901760
        %v357 = vsub.f32 %v355, %v356
        %v358 = vand.u32 %v357, 4294901760
        %359 = vmatpush.msra.mxu0 %v358
        %v360 = vand.u32 %v261, 4294901760
        %v361 = vsub.f32 %v261, %v360
        %v362 = vand.u32 %v361, 4294901760
        %v363 = vsub.f32 %v361, %v362
        %v364 = vand.u32 %v363, 4294901760
        %365 = vmatpush.msra.mxu0 %v364
        %v366 = vand.u32 %v260, 4294901760
        %v367 = vsub.f32 %v260, %v366
        %v368 = vand.u32 %v367, 4294901760
        %v369 = vsub.f32 %v367, %v368
        %v370 = vand.u32 %v369, 4294901760
        %371 = vmatpush.msra.mxu0 %v370
        %v372 = vand.u32 %v259, 4294901760
        %v373 = vsub.f32 %v259, %v372
        %v374 = vand.u32 %v373, 4294901760
        %v375 = vsub.f32 %v373, %v374
        %v376 = vand.u32 %v375, 4294901760
        %377 = vmatpush.msra.mxu0 %v376
        %v378 = vand.u32 %v258, 4294901760
        %v379 = vsub.f32 %v258, %v378
        %v380 = vand.u32 %v379, 4294901760
        %v381 = vsub.f32 %v379, %v380
        %v382 = vand.u32 %v381, 4294901760
        %383 = vmatpush.msra.mxu0 %v382
        %v384 = vand.u32 %v257, 4294901760
        %v385 = vsub.f32 %v257, %v384
        %v386 = vand.u32 %v385, 4294901760
        %v387 = vsub.f32 %v385, %v386
        %v388 = vand.u32 %v387, 4294901760
        %389 = vmatpush.msra.mxu0 %v388
        %v390 = vand.u32 %v256, 4294901760
        %v391 = vsub.f32 %v256, %v390
        %v392 = vand.u32 %v391, 4294901760
        %v393 = vsub.f32 %v391, %v392
        %v394 = vand.u32 %v393, 4294901760
        %395 = vmatpush.msra.mxu0 %v394
        %v396 = vand.u32 %v255, 4294901760
        %v397 = vsub.f32 %v255, %v396
        %v398 = vand.u32 %v397, 4294901760
        %v399 = vsub.f32 %v397, %v398
        %v400 = vand.u32 %v399, 4294901760
        %401 = vmatpush.msra.mxu0 %v400
        %v402 = vand.u32 %v254, 4294901760
        %v403 = vsub.f32 %v254, %v402
        %v404 = vand.u32 %v403, 4294901760
        %v405 = vsub.f32 %v403, %v404
        %v406 = vand.u32 %v405, 4294901760
        %407 = vmatpush.msra.mxu0 %v406
        %v408 = vand.u32 %v253, 4294901760
        %v409 = vsub.f32 %v253, %v408
        %v410 = vand.u32 %v409, 4294901760
        %v411 = vsub.f32 %v409, %v410
        %v412 = vand.u32 %v411, 4294901760
        %413 = vmatpush.msra.mxu0 %v412
        %v414 = vand.u32 %v251, 4294901760
        %415 = vmatmul.f32.gmra.mxu0 %v414
        %v416 = vpop.f32.mrf.mxu0
        %v417 = vadd.f32 %v308, %v416
        %v418 = vand.u32 %v252, 4294901760
        %419 = vmatmul.f32.gmra.mxu0 %v418
        %v420 = vpop.f32.mrf.mxu0
        %v421 = vadd.f32 %v316, %v420
        %422 = vdwg.mxu0
        %v423 = vand.u32 %v268, 4294901760
        %v424 = vsub.f32 %v268, %v423
        %425 = vmatpush.msra.mxu0 %v424
        %v426 = vand.u32 %v267, 4294901760
        %v427 = vsub.f32 %v267, %v426
        %428 = vmatpush.msra.mxu0 %v427
        %v429 = vand.u32 %v266, 4294901760
        %v430 = vsub.f32 %v266, %v429
        %431 = vmatpush.msra.mxu0 %v430
        %v432 = vand.u32 %v265, 4294901760
        %v433 = vsub.f32 %v265, %v432
        %434 = vmatpush.msra.mxu0 %v433
        %v435 = vand.u32 %v264, 4294901760
        %v436 = vsub.f32 %v264, %v435
        %437 = vmatpush.msra.mxu0 %v436
        %v438 = vand.u32 %v263, 4294901760
        %v439 = vsub.f32 %v263, %v438
        %440 = vmatpush.msra.mxu0 %v439
        %v441 = vand.u32 %v262, 4294901760
        %v442 = vsub.f32 %v262, %v441
        %443 = vmatpush.msra.mxu0 %v442
        %v444 = vand.u32 %v261, 4294901760
        %v445 = vsub.f32 %v261, %v444
        %446 = vmatpush.msra.mxu0 %v445
        %v447 = vand.u32 %v260, 4294901760
        %v448 = vsub.f32 %v260, %v447
        %449 = vmatpush.msra.mxu0 %v448
        %v450 = vand.u32 %v259, 4294901760
        %v451 = vsub.f32 %v259, %v450
        %452 = vmatpush.msra.mxu0 %v451
        %v453 = vand.u32 %v258, 4294901760
        %v454 = vsub.f32 %v258, %v453
        %455 = vmatpush.msra.mxu0 %v454
        %v456 = vand.u32 %v257, 4294901760
        %v457 = vsub.f32 %v257, %v456
        %458 = vmatpush.msra.mxu0 %v457
        %v459 = vand.u32 %v256, 4294901760
        %v460 = vsub.f32 %v256, %v459
        %461 = vmatpush.msra.mxu0 %v460
        %v462 = vand.u32 %v255, 4294901760
        %v463 = vsub.f32 %v255, %v462
        %464 = vmatpush.msra.mxu0 %v463
        %v465 = vand.u32 %v254, 4294901760
        %v466 = vsub.f32 %v254, %v465
        %467 = vmatpush.msra.mxu0 %v466
        %v468 = vand.u32 %v253, 4294901760
        %v469 = vsub.f32 %v253, %v468
        %470 = vmatpush.msra.mxu0 %v469
        %v471 = vand.u32 %v251, 4294901760
        %v472 = vsub.f32 %v251, %v471
        %473 = vmatmul.f32.gmra.mxu0 %v472
        %v474 = vpop.f32.mrf.mxu0
        %v475 = vadd.f32 %v417, %v474
        %v476 = vand.u32 %v252, 4294901760
        %v477 = vsub.f32 %v252, %v476
        %478 = vmatmul.f32.gmra.mxu0 %v477
        %v479 = vpop.f32.mrf.mxu0
        %v480 = vadd.f32 %v421, %v479
        %481 = vdwg.mxu0
        %v482 = vand.u32 %v268, 4294901760
        %483 = vmatpush.msra.mxu0 %v482
        %v484 = vand.u32 %v267, 4294901760
        %485 = vmatpush.msra.mxu0 %v484
        %v486 = vand.u32 %v266, 4294901760
        %487 = vmatpush.msra.mxu0 %v486
        %v488 = vand.u32 %v265, 4294901760
        %489 = vmatpush.msra.mxu0 %v488
        %v490 = vand.u32 %v264, 4294901760
        %491 = vmatpush.msra.mxu0 %v490
        %v492 = vand.u32 %v263, 4294901760
        %493 = vmatpush.msra.mxu0 %v492
        %v494 = vand.u32 %v262, 4294901760
        %495 = vmatpush.msra.mxu0 %v494
        %v496 = vand.u32 %v261, 4294901760
        %497 = vmatpush.msra.mxu0 %v496
        %v498 = vand.u32 %v260, 4294901760
        %499 = vmatpush.msra.mxu0 %v498
        %v500 = vand.u32 %v259, 4294901760
        %501 = vmatpush.msra.mxu0 %v500
        %v502 = vand.u32 %v258, 4294901760
        %503 = vmatpush.msra.mxu0 %v502
        %v504 = vand.u32 %v257, 4294901760
        %505 = vmatpush.msra.mxu0 %v504
        %v506 = vand.u32 %v256, 4294901760
        %507 = vmatpush.msra.mxu0 %v506
        %v508 = vand.u32 %v255, 4294901760
        %509 = vmatpush.msra.mxu0 %v508
        %v510 = vand.u32 %v254, 4294901760
        %511 = vmatpush.msra.mxu0 %v510
        %v512 = vand.u32 %v253, 4294901760
        %513 = vmatpush.msra.mxu0 %v512
        %v514 = vand.u32 %v251, 4294901760
        %v515 = vsub.f32 %v251, %v514
        %v516 = vand.u32 %v515, 4294901760
        %517 = vmatmul.f32.gmra.mxu0 %v516
        %v518 = vpop.f32.mrf.mxu0
        %v519 = vadd.f32 %v475, %v518
        %v520 = vand.u32 %v252, 4294901760
        %v521 = vsub.f32 %v252, %v520
        %v522 = vand.u32 %v521, 4294901760
        %523 = vmatmul.f32.gmra.mxu0 %v522
        %v524 = vpop.f32.mrf.mxu0
        %v525 = vadd.f32 %v480, %v524
        %526 = vdwg.mxu0
        %v527 = vand.u32 %v268, 4294901760
        %v528 = vsub.f32 %v268, %v527
        %v529 = vand.u32 %v528, 4294901760
        %530 = vmatpush.msra.mxu0 %v529
        %v531 = vand.u32 %v267, 4294901760
        %v532 = vsub.f32 %v267, %v531
        %v533 = vand.u32 %v532, 4294901760
        %534 = vmatpush.msra.mxu0 %v533
        %v535 = vand.u32 %v266, 4294901760
        %v536 = vsub.f32 %v266, %v535
        %v537 = vand.u32 %v536, 4294901760
        %538 = vmatpush.msra.mxu0 %v537
        %v539 = vand.u32 %v265, 4294901760
        %v540 = vsub.f32 %v265, %v539
        %v541 = vand.u32 %v540, 4294901760
        %542 = vmatpush.msra.mxu0 %v541
        %v543 = vand.u32 %v264, 4294901760
        %v544 = vsub.f32 %v264, %v543
        %v545 = vand.u32 %v544, 4294901760
        %546 = vmatpush.msra.mxu0 %v545
        %v547 = vand.u32 %v263, 4294901760
        %v548 = vsub.f32 %v263, %v547
        %v549 = vand.u32 %v548, 4294901760
        %550 = vmatpush.msra.mxu0 %v549
        %v551 = vand.u32 %v262, 4294901760
        %v552 = vsub.f32 %v262, %v551
        %v553 = vand.u32 %v552, 4294901760
        %554 = vmatpush.msra.mxu0 %v553
        %v555 = vand.u32 %v261, 4294901760
        %v556 = vsub.f32 %v261, %v555
        %v557 = vand.u32 %v556, 4294901760
        %558 = vmatpush.msra.mxu0 %v557
        %v559 = vand.u32 %v260, 4294901760
        %v560 = vsub.f32 %v260, %v559
        %v561 = vand.u32 %v560, 4294901760
        %562 = vmatpush.msra.mxu0 %v561
        %v563 = vand.u32 %v259, 4294901760
        %v564 = vsub.f32 %v259, %v563
        %v565 = vand.u32 %v564, 4294901760
        %566 = vmatpush.msra.mxu0 %v565
        %v567 = vand.u32 %v258, 4294901760
        %v568 = vsub.f32 %v258, %v567
        %v569 = vand.u32 %v568, 4294901760
        %570 = vmatpush.msra.mxu0 %v569
        %v571 = vand.u32 %v257, 4294901760
        %v572 = vsub.f32 %v257, %v571
        %v573 = vand.u32 %v572, 4294901760
        %574 = vmatpush.msra.mxu0 %v573
        %v575 = vand.u32 %v256, 4294901760
        %v576 = vsub.f32 %v256, %v575
        %v577 = vand.u32 %v576, 4294901760
        %578 = vmatpush.msra.mxu0 %v577
        %v579 = vand.u32 %v255, 4294901760
        %v580 = vsub.f32 %v255, %v579
        %v581 = vand.u32 %v580, 4294901760
        %582 = vmatpush.msra.mxu0 %v581
        %v583 = vand.u32 %v254, 4294901760
        %v584 = vsub.f32 %v254, %v583
        %v585 = vand.u32 %v584, 4294901760
        %586 = vmatpush.msra.mxu0 %v585
        %v587 = vand.u32 %v253, 4294901760
        %v588 = vsub.f32 %v253, %v587
        %v589 = vand.u32 %v588, 4294901760
        %590 = vmatpush.msra.mxu0 %v589
        %v591 = vand.u32 %v251, 4294901760
        %592 = vmatmul.f32.gmra.mxu0 %v591
        %v593 = vpop.f32.mrf.mxu0
        %v594 = vadd.f32 %v519, %v593
        %v595 = vand.u32 %v252, 4294901760
        %596 = vmatmul.f32.gmra.mxu0 %v595
        %v597 = vpop.f32.mrf.mxu0
        %v598 = vadd.f32 %v525, %v597
        %599 = vdwg.mxu0
        %v600 = vand.u32 %v268, 4294901760
        %601 = vmatpush.msra.mxu0 %v600
        %v602 = vand.u32 %v267, 4294901760
        %603 = vmatpush.msra.mxu0 %v602
        %v604 = vand.u32 %v266, 4294901760
        %605 = vmatpush.msra.mxu0 %v604
        %v606 = vand.u32 %v265, 4294901760
        %607 = vmatpush.msra.mxu0 %v606
        %v608 = vand.u32 %v264, 4294901760
        %609 = vmatpush.msra.mxu0 %v608
        %v610 = vand.u32 %v263, 4294901760
        %611 = vmatpush.msra.mxu0 %v610
        %v612 = vand.u32 %v262, 4294901760
        %613 = vmatpush.msra.mxu0 %v612
        %v614 = vand.u32 %v261, 4294901760
        %615 = vmatpush.msra.mxu0 %v614
        %v616 = vand.u32 %v260, 4294901760
        %617 = vmatpush.msra.mxu0 %v616
        %v618 = vand.u32 %v259, 4294901760
        %619 = vmatpush.msra.mxu0 %v618
        %v620 = vand.u32 %v258, 4294901760
        %621 = vmatpush.msra.mxu0 %v620
        %v622 = vand.u32 %v257, 4294901760
        %623 = vmatpush.msra.mxu0 %v622
        %v624 = vand.u32 %v256, 4294901760
        %625 = vmatpush.msra.mxu0 %v624
        %v626 = vand.u32 %v255, 4294901760
        %627 = vmatpush.msra.mxu0 %v626
        %v628 = vand.u32 %v254, 4294901760
        %629 = vmatpush.msra.mxu0 %v628
        %v630 = vand.u32 %v253, 4294901760
        %631 = vmatpush.msra.mxu0 %v630
        %v632 = vand.u32 %v251, 4294901760
        %633 = vmatmul.f32.gmra.mxu0 %v632
        %v634 = vpop.f32.mrf.mxu0
        %v635 = vadd.f32 %v594, %v634
        %v636 = vand.u32 %v252, 4294901760
        %637 = vmatmul.f32.gmra.mxu0 %v636
        %v638 = vpop.f32.mrf.mxu0
        %v639 = vadd.f32 %v598, %v638
        %640 = vdwg.mxu0
        %v641 = vsub.f32 %v251, %v635
        %v642 = vsub.f32 %v252, %v639
        %v643 = vmul.f32 %v641, %v641
        %v644 = vmul.f32 %v642, %v642
        %v645 = vand.u32 %v268, 4294901760
        %646 = vmatpush.msra.mxu0 %v645
        %v647 = vand.u32 %v267, 4294901760
        %648 = vmatpush.msra.mxu0 %v647
        %v649 = vand.u32 %v266, 4294901760
        %650 = vmatpush.msra.mxu0 %v649
        %v651 = vand.u32 %v265, 4294901760
        %652 = vmatpush.msra.mxu0 %v651
        %v653 = vand.u32 %v264, 4294901760
        %654 = vmatpush.msra.mxu0 %v653
        %v655 = vand.u32 %v263, 4294901760
        %656 = vmatpush.msra.mxu0 %v655
        %v657 = vand.u32 %v262, 4294901760
        %658 = vmatpush.msra.mxu0 %v657
        %v659 = vand.u32 %v261, 4294901760
        %660 = vmatpush.msra.mxu0 %v659
        %v661 = vand.u32 %v260, 4294901760
        %662 = vmatpush.msra.mxu0 %v661
        %v663 = vand.u32 %v259, 4294901760
        %664 = vmatpush.msra.mxu0 %v663
        %v665 = vand.u32 %v258, 4294901760
        %666 = vmatpush.msra.mxu0 %v665
        %v667 = vand.u32 %v257, 4294901760
        %668 = vmatpush.msra.mxu0 %v667
        %v669 = vand.u32 %v256, 4294901760
        %670 = vmatpush.msra.mxu0 %v669
        %v671 = vand.u32 %v255, 4294901760
        %672 = vmatpush.msra.mxu0 %v671
        %v673 = vand.u32 %v254, 4294901760
        %674 = vmatpush.msra.mxu0 %v673
        %v675 = vand.u32 %v253, 4294901760
        %676 = vmatpush.msra.mxu0 %v675
        %v677 = vand.u32 %v643, 4294901760
        %v678 = vsub.f32 %v643, %v677
        %v679 = vand.u32 %v678, 4294901760
        %v680 = vsub.f32 %v678, %v679
        %v681 = vand.u32 %v680, 4294901760
        %682 = vmatmul.f32.gmra.mxu0 %v681
        %v683 = vpop.f32.mrf.mxu0
        %v684 = vadd.f32 1e-05, %v683
        %v685 = vand.u32 %v644, 4294901760
        %v686 = vsub.f32 %v644, %v685
        %v687 = vand.u32 %v686, 4294901760
        %v688 = vsub.f32 %v686, %v687
        %v689 = vand.u32 %v688, 4294901760
        %690 = vmatmul.f32.gmra.mxu0 %v689
        %v691 = vpop.f32.mrf.mxu0
        %v692 = vadd.f32 1e-05, %v691
        %693 = vdwg.mxu0
        %v694 = vand.u32 %v268, 4294901760
        %v695 = vsub.f32 %v268, %v694
        %v696 = vand.u32 %v695, 4294901760
        %v697 = vsub.f32 %v695, %v696
        %v698 = vand.u32 %v697, 4294901760
        %699 = vmatpush.msra.mxu0 %v698
        %v700 = vand.u32 %v267, 4294901760
        %v701 = vsub.f32 %v267, %v700
        %v702 = vand.u32 %v701, 4294901760
        %v703 = vsub.f32 %v701, %v702
        %v704 = vand.u32 %v703, 4294901760
        %705 = vmatpush.msra.mxu0 %v704
        %v706 = vand.u32 %v266, 4294901760
        %v707 = vsub.f32 %v266, %v706
        %v708 = vand.u32 %v707, 4294901760
        %v709 = vsub.f32 %v707, %v708
        %v710 = vand.u32 %v709, 4294901760
        %711 = vmatpush.msra.mxu0 %v710
        %v712 = vand.u32 %v265, 4294901760
        %v713 = vsub.f32 %v265, %v712
        %v714 = vand.u32 %v713, 4294901760
        %v715 = vsub.f32 %v713, %v714
        %v716 = vand.u32 %v715, 4294901760
        %717 = vmatpush.msra.mxu0 %v716
        %v718 = vand.u32 %v264, 4294901760
        %v719 = vsub.f32 %v264, %v718
        %v720 = vand.u32 %v719, 4294901760
        %v721 = vsub.f32 %v719, %v720
        %v722 = vand.u32 %v721, 4294901760
        %723 = vmatpush.msra.mxu0 %v722
        %v724 = vand.u32 %v263, 4294901760
        %v725 = vsub.f32 %v263, %v724
        %v726 = vand.u32 %v725, 4294901760
        %v727 = vsub.f32 %v725, %v726
        %v728 = vand.u32 %v727, 4294901760
        %729 = vmatpush.msra.mxu0 %v728
        %v730 = vand.u32 %v262, 4294901760
        %v731 = vsub.f32 %v262, %v730
        %v732 = vand.u32 %v731, 4294901760
        %v733 = vsub.f32 %v731, %v732
        %v734 = vand.u32 %v733, 4294901760
        %735 = vmatpush.msra.mxu0 %v734
        %v736 = vand.u32 %v261, 4294901760
        %v737 = vsub.f32 %v261, %v736
        %v738 = vand.u32 %v737, 4294901760
        %v739 = vsub.f32 %v737, %v738
        %v740 = vand.u32 %v739, 4294901760
        %741 = vmatpush.msra.mxu0 %v740
        %v742 = vand.u32 %v260, 4294901760
        %v743 = vsub.f32 %v260, %v742
        %v744 = vand.u32 %v743, 4294901760
        %v745 = vsub.f32 %v743, %v744
        %v746 = vand.u32 %v745, 4294901760
        %747 = vmatpush.msra.mxu0 %v746
        %v748 = vand.u32 %v259, 4294901760
        %v749 = vsub.f32 %v259, %v748
        %v750 = vand.u32 %v749, 4294901760
        %v751 = vsub.f32 %v749, %v750
        %v752 = vand.u32 %v751, 4294901760
        %753 = vmatpush.msra.mxu0 %v752
        %v754 = vand.u32 %v258, 4294901760
        %v755 = vsub.f32 %v258, %v754
        %v756 = vand.u32 %v755, 4294901760
        %v757 = vsub.f32 %v755, %v756
        %v758 = vand.u32 %v757, 4294901760
        %759 = vmatpush.msra.mxu0 %v758
        %v760 = vand.u32 %v257, 4294901760
        %v761 = vsub.f32 %v257, %v760
        %v762 = vand.u32 %v761, 4294901760
        %v763 = vsub.f32 %v761, %v762
        %v764 = vand.u32 %v763, 4294901760
        %765 = vmatpush.msra.mxu0 %v764
        %v766 = vand.u32 %v256, 4294901760
        %v767 = vsub.f32 %v256, %v766
        %v768 = vand.u32 %v767, 4294901760
        %v769 = vsub.f32 %v767, %v768
        %v770 = vand.u32 %v769, 4294901760
        %771 = vmatpush.msra.mxu0 %v770
        %v772 = vand.u32 %v255, 4294901760
        %v773 = vsub.f32 %v255, %v772
        %v774 = vand.u32 %v773, 4294901760
        %v775 = vsub.f32 %v773, %v774
        %v776 = vand.u32 %v775, 4294901760
        %777 = vmatpush.msra.mxu0 %v776
        %v778 = vand.u32 %v254, 4294901760
        %v779 = vsub.f32 %v254, %v778
        %v780 = vand.u32 %v779, 4294901760
        %v781 = vsub.f32 %v779, %v780
        %v782 = vand.u32 %v781, 4294901760
        %783 = vmatpush.msra.mxu0 %v782
        %v784 = vand.u32 %v253, 4294901760
        %v785 = vsub.f32 %v253, %v784
        %v786 = vand.u32 %v785, 4294901760
        %v787 = vsub.f32 %v785, %v786
        %v788 = vand.u32 %v787, 4294901760
        %789 = vmatpush.msra.mxu0 %v788
        %v790 = vand.u32 %v643, 4294901760
        %791 = vmatmul.f32.gmra.mxu0 %v790
        %v792 = vpop.f32.mrf.mxu0
        %v793 = vadd.f32 %v684, %v792
        %v794 = vand.u32 %v644, 4294901760
        %795 = vmatmul.f32.gmra.mxu0 %v794
        %v796 = vpop.f32.mrf.mxu0
        %v797 = vadd.f32 %v692, %v796
        %798 = vdwg.mxu0
        %v799 = vand.u32 %v268, 4294901760
        %v800 = vsub.f32 %v268, %v799
        %801 = vmatpush.msra.mxu0 %v800
        %v802 = vand.u32 %v267, 4294901760
        %v803 = vsub.f32 %v267, %v802
        %804 = vmatpush.msra.mxu0 %v803
        %v805 = vand.u32 %v266, 4294901760
        %v806 = vsub.f32 %v266, %v805
        %807 = vmatpush.msra.mxu0 %v806
        %v808 = vand.u32 %v265, 4294901760
        %v809 = vsub.f32 %v265, %v808
        %810 = vmatpush.msra.mxu0 %v809
        %v811 = vand.u32 %v264, 4294901760
        %v812 = vsub.f32 %v264, %v811
        %813 = vmatpush.msra.mxu0 %v812
        %v814 = vand.u32 %v263, 4294901760
        %v815 = vsub.f32 %v263, %v814
        %816 = vmatpush.msra.mxu0 %v815
        %v817 = vand.u32 %v262, 4294901760
        %v818 = vsub.f32 %v262, %v817
        %819 = vmatpush.msra.mxu0 %v818
        %v820 = vand.u32 %v261, 4294901760
        %v821 = vsub.f32 %v261, %v820
        %822 = vmatpush.msra.mxu0 %v821
        %v823 = vand.u32 %v260, 4294901760
        %v824 = vsub.f32 %v260, %v823
        %825 = vmatpush.msra.mxu0 %v824
        %v826 = vand.u32 %v259, 4294901760
        %v827 = vsub.f32 %v259, %v826
        %828 = vmatpush.msra.mxu0 %v827
        %v829 = vand.u32 %v258, 4294901760
        %v830 = vsub.f32 %v258, %v829
        %831 = vmatpush.msra.mxu0 %v830
        %v832 = vand.u32 %v257, 4294901760
        %v833 = vsub.f32 %v257, %v832
        %834 = vmatpush.msra.mxu0 %v833
        %v835 = vand.u32 %v256, 4294901760
        %v836 = vsub.f32 %v256, %v835
        %837 = vmatpush.msra.mxu0 %v836
        %v838 = vand.u32 %v255, 4294901760
        %v839 = vsub.f32 %v255, %v838
        %840 = vmatpush.msra.mxu0 %v839
        %v841 = vand.u32 %v254, 4294901760
        %v842 = vsub.f32 %v254, %v841
        %843 = vmatpush.msra.mxu0 %v842
        %v844 = vand.u32 %v253, 4294901760
        %v845 = vsub.f32 %v253, %v844
        %846 = vmatpush.msra.mxu0 %v845
        %v847 = vand.u32 %v643, 4294901760
        %v848 = vsub.f32 %v643, %v847
        %849 = vmatmul.f32.gmra.mxu0 %v848
        %v850 = vpop.f32.mrf.mxu0
        %v851 = vadd.f32 %v793, %v850
        %v852 = vand.u32 %v644, 4294901760
        %v853 = vsub.f32 %v644, %v852
        %854 = vmatmul.f32.gmra.mxu0 %v853
        %v855 = vpop.f32.mrf.mxu0
        %v856 = vadd.f32 %v797, %v855
        %857 = vdwg.mxu0
        %v858 = vand.u32 %v268, 4294901760
        %859 = vmatpush.msra.mxu0 %v858
        %v860 = vand.u32 %v267, 4294901760
        %861 = vmatpush.msra.mxu0 %v860
        %v862 = vand.u32 %v266, 4294901760
        %863 = vmatpush.msra.mxu0 %v862
        %v864 = vand.u32 %v265, 4294901760
        %865 = vmatpush.msra.mxu0 %v864
        %v866 = vand.u32 %v264, 4294901760
        %867 = vmatpush.msra.mxu0 %v866
        %v868 = vand.u32 %v263, 4294901760
        %869 = vmatpush.msra.mxu0 %v868
        %v870 = vand.u32 %v262, 4294901760
        %871 = vmatpush.msra.mxu0 %v870
        %v872 = vand.u32 %v261, 4294901760
        %873 = vmatpush.msra.mxu0 %v872
        %v874 = vand.u32 %v260, 4294901760
        %875 = vmatpush.msra.mxu0 %v874
        %v876 = vand.u32 %v259, 4294901760
        %877 = vmatpush.msra.mxu0 %v876
        %v878 = vand.u32 %v258, 4294901760
        %879 = vmatpush.msra.mxu0 %v878
        %v880 = vand.u32 %v257, 4294901760
        %881 = vmatpush.msra.mxu0 %v880
        %v882 = vand.u32 %v256, 4294901760
        %883 = vmatpush.msra.mxu0 %v882
        %v884 = vand.u32 %v255, 4294901760
        %885 = vmatpush.msra.mxu0 %v884
        %v886 = vand.u32 %v254, 4294901760
        %887 = vmatpush.msra.mxu0 %v886
        %v888 = vand.u32 %v253, 4294901760
        %889 = vmatpush.msra.mxu0 %v888
        %v890 = vand.u32 %v643, 4294901760
        %v891 = vsub.f32 %v643, %v890
        %v892 = vand.u32 %v891, 4294901760
        %893 = vmatmul.f32.gmra.mxu0 %v892
        %v894 = vpop.f32.mrf.mxu0
        %v895 = vadd.f32 %v851, %v894
        %v896 = vand.u32 %v644, 4294901760
        %v897 = vsub.f32 %v644, %v896
        %v898 = vand.u32 %v897, 4294901760
        %899 = vmatmul.f32.gmra.mxu0 %v898
        %v900 = vpop.f32.mrf.mxu0
        %v901 = vadd.f32 %v856, %v900
        %902 = vdwg.mxu0
        %v903 = vand.u32 %v268, 4294901760
        %v904 = vsub.f32 %v268, %v903
        %v905 = vand.u32 %v904, 4294901760
        %906 = vmatpush.msra.mxu0 %v905
        %v907 = vand.u32 %v267, 4294901760
        %v908 = vsub.f32 %v267, %v907
        %v909 = vand.u32 %v908, 4294901760
        %910 = vmatpush.msra.mxu0 %v909
        %v911 = vand.u32 %v266, 4294901760
        %v912 = vsub.f32 %v266, %v911
        %v913 = vand.u32 %v912, 4294901760
        %914 = vmatpush.msra.mxu0 %v913
        %v915 = vand.u32 %v265, 4294901760
        %v916 = vsub.f32 %v265, %v915
        %v917 = vand.u32 %v916, 4294901760
        %918 = vmatpush.msra.mxu0 %v917
        %v919 = vand.u32 %v264, 4294901760
        %v920 = vsub.f32 %v264, %v919
        %v921 = vand.u32 %v920, 4294901760
        %922 = vmatpush.msra.mxu0 %v921
        %v923 = vand.u32 %v263, 4294901760
        %v924 = vsub.f32 %v263, %v923
        %v925 = vand.u32 %v924, 4294901760
        %926 = vmatpush.msra.mxu0 %v925
        %v927 = vand.u32 %v262, 4294901760
        %v928 = vsub.f32 %v262, %v927
        %v929 = vand.u32 %v928, 4294901760
        %930 = vmatpush.msra.mxu0 %v929
        %v931 = vand.u32 %v261, 4294901760
        %v932 = vsub.f32 %v261, %v931
        %v933 = vand.u32 %v932, 4294901760
        %934 = vmatpush.msra.mxu0 %v933
        %v935 = vand.u32 %v260, 4294901760
        %v936 = vsub.f32 %v260, %v935
        %v937 = vand.u32 %v936, 4294901760
        %938 = vmatpush.msra.mxu0 %v937
        %v939 = vand.u32 %v259, 4294901760
        %v940 = vsub.f32 %v259, %v939
        %v941 = vand.u32 %v940, 4294901760
        %942 = vmatpush.msra.mxu0 %v941
        %v943 = vand.u32 %v258, 4294901760
        %v944 = vsub.f32 %v258, %v943
        %v945 = vand.u32 %v944, 4294901760
        %946 = vmatpush.msra.mxu0 %v945
        %v947 = vand.u32 %v257, 4294901760
        %v948 = vsub.f32 %v257, %v947
        %v949 = vand.u32 %v948, 4294901760
        %950 = vmatpush.msra.mxu0 %v949
        %v951 = vand.u32 %v256, 4294901760
        %v952 = vsub.f32 %v256, %v951
        %v953 = vand.u32 %v952, 4294901760
        %954 = vmatpush.msra.mxu0 %v953
        %v955 = vand.u32 %v255, 4294901760
        %v956 = vsub.f32 %v255, %v955
        %v957 = vand.u32 %v956, 4294901760
        %958 = vmatpush.msra.mxu0 %v957
        %v959 = vand.u32 %v254, 4294901760
        %v960 = vsub.f32 %v254, %v959
        %v961 = vand.u32 %v960, 4294901760
        %962 = vmatpush.msra.mxu0 %v961
        %v963 = vand.u32 %v253, 4294901760
        %v964 = vsub.f32 %v253, %v963
        %v965 = vand.u32 %v964, 4294901760
        %966 = vmatpush.msra.mxu0 %v965
        %v967 = vand.u32 %v643, 4294901760
        %968 = vmatmul.f32.gmra.mxu0 %v967
        %v969 = vpop.f32.mrf.mxu0
        %v970 = vadd.f32 %v895, %v969
        %v971 = vand.u32 %v644, 4294901760
        %972 = vmatmul.f32.gmra.mxu0 %v971
        %v973 = vpop.f32.mrf.mxu0
        %v974 = vadd.f32 %v901, %v973
        %975 = vdwg.mxu0
        %v976 = vand.u32 %v268, 4294901760
        %977 = vmatpush.msra.mxu0 %v976
        %v978 = vand.u32 %v267, 4294901760
        %979 = vmatpush.msra.mxu0 %v978
        %v980 = vand.u32 %v266, 4294901760
        %981 = vmatpush.msra.mxu0 %v980
        %v982 = vand.u32 %v265, 4294901760
        %983 = vmatpush.msra.mxu0 %v982
        %v984 = vand.u32 %v264, 4294901760
        %985 = vmatpush.msra.mxu0 %v984
        %v986 = vand.u32 %v263, 4294901760
        %987 = vmatpush.msra.mxu0 %v986
        %v988 = vand.u32 %v262, 4294901760
        %989 = vmatpush.msra.mxu0 %v988
        %v990 = vand.u32 %v261, 4294901760
        %991 = vmatpush.msra.mxu0 %v990
        %v992 = vand.u32 %v260, 4294901760
        %993 = vmatpush.msra.mxu0 %v992
        %v994 = vand.u32 %v259, 4294901760
        %995 = vmatpush.msra.mxu0 %v994
        %v996 = vand.u32 %v258, 4294901760
        %997 = vmatpush.msra.mxu0 %v996
        %v998 = vand.u32 %v257, 4294901760
        %999 = vmatpush.msra.mxu0 %v998
        %v1000 = vand.u32 %v256, 4294901760
        %1001 = vmatpush.msra.mxu0 %v1000
        %v1002 = vand.u32 %v255, 4294901760
        %1003 = vmatpush.msra.mxu0 %v1002
        %v1004 = vand.u32 %v254, 4294901760
        %1005 = vmatpush.msra.mxu0 %v1004
        %v1006 = vand.u32 %v253, 4294901760
        %1007 = vmatpush.msra.mxu0 %v1006
        %v1008 = vand.u32 %v643, 4294901760
        %1009 = vmatmul.f32.gmra.mxu0 %v1008
        %v1010 = vpop.f32.mrf.mxu0
        %v1011 = vadd.f32 %v970, %v1010
        %v1012 = vand.u32 %v644, 4294901760
        %1013 = vmatmul.f32.gmra.mxu0 %v1012
        %v1014 = vpop.f32.mrf.mxu0
        %v1015 = vadd.f32 %v974, %v1014
        %1016 = vdwg.mxu0
        %v1017 = vrsqrt.pop %v1011
        %v1018 = vmul.f32 %v1017, %v1011
        %v1019 = vmul.f32 %v1018, %v1017
        %v1020 = vmul.f32 0.5, %v1019
        %v1021 = vsub.f32 1.5, %v1020
        %v1022 = vmul.f32 %v1017, %v1021
        %vm1023 = vweird.f32 %v1011
        %vm1024 = vweird.f32 %v1017
        %vm1025 = vmor %vm1023, %vm1024
        %v1026 = vsel %vm1025, %v1017, %v1022
        %v1027 = vrsqrt.pop %v1015
        %v1028 = vmul.f32 %v1027, %v1015
        %v1029 = vmul.f32 %v1028, %v1027
        %v1030 = vmul.f32 0.5, %v1029
        %v1031 = vsub.f32 1.5, %v1030
        %v1032 = vmul.f32 %v1027, %v1031
        %vm1033 = vweird.f32 %v1015
        %vm1034 = vweird.f32 %v1027
        %vm1035 = vmor %vm1033, %vm1034
        %v1036 = vsel %vm1035, %v1027, %v1032
        %v1037 = vmul.f32 %v641, %v1026
        %v1038 = vmul.f32 %v642, %v1036
        %v1039 = vld [vmem:[#allocation5] sm:$0x1]
        %v1041 = vperm.slane %v1039, 0
        %v1043 = vmul.f32 %v1037, %v1041
        %v1044 = vmul.f32 %v1038, %v1041
        %v1045 = vld [vmem:[%s2] sm:$0x1]
        %v1047 = vperm.slane %v1045, 0
        %v1049 = vadd.f32 %v1043, %v1047
        %v1050 = vadd.f32 %v1044, %v1047
        %1051 = vst [vmem:[%s248] sm:$0xff] %v1049
        %1052 = vst [vmem:[%s248 + $0x8] sm:$0xff] %v1050
        %s1053 = sand.u32 %s119, 1
        %s1054 = scalar_lea.sflag [#allocation4], %s1053
        %s1055 = sand.u32 %s119, 1
        %s1056 = smul.addr %s1055, 16
        %s1057 = scalar_lea.vmem [#allocation8], %s1056
        // Predicated region
        $region49: #{tpu_custom_call.1} parent=35 // pred_check
          %p1058 = pneg %p129
        $region50: #{tpu_custom_call.1} parent=35 // pred_check_branch
          %1060 = sbr.rel (%p1058) target = $region52
        $region51: #{tpu_custom_call.1} parent=35 // pred_region
          %s1061 = smul.u32 2, %s22
          %1063 = vsyncadd %s1054, 0
          %s1064 = smul.addr %s1061, 8
          %s1065 = scalar_lea.hbm %s4, %s1064
          %s1066 = sshll.u32 %s1057, 4
          %s1067 = int_to_ptr.vmem [resolvable:$true] %s1066
          %s1068 = sshll.u32 %s1065, 4
          %s1069 = int_to_ptr.hbm [resolvable:$true] %s1068
          %1074 = dma.vmem_to_hbm [thread:$0]  %s1067, 256, %s1069, %s1054, 128, 128, 8
        $region52: #{tpu_custom_call.1} parent=35 // pred_fallthru
          _
      $region36: #{tpu_custom_call.1} parent=5 // pred_fallthru
        _
      %p1075 = scmp.le.s32.totalorder 2, %s17
      // Predicated region
      $region53: #{tpu_custom_call.1} parent=5 // pred_check
        %p1076 = pneg %p1075
      $region54: #{tpu_custom_call.1} parent=5 // pred_check_branch
        %1078 = sbr.rel (%p1076) target = $region56
      $region55: #{tpu_custom_call.1} parent=5 // pred_region
        %s1079 = ssub.s32 %s17, 2
        // Predicated region
        $region57: #{tpu_custom_call.1} parent=55 // pred_check
          %p1080 = pneg %p135
        $region58: #{tpu_custom_call.1} parent=55 // pred_check_branch
          %1082 = sbr.rel (%p1080) target = $region60
        $region59: #{tpu_custom_call.1} parent=55 // pred_region
          %s1083 = sand.u32 %s120, 1
          %s1084 = scalar_lea.sflag [#allocation4], %s1083
          %s1085 = sand.u32 %s120, 1
          %s1086 = smul.addr %s1085, 16
          %s1087 = scalar_lea.vmem [#allocation8], %s1086
          %1089 = dma.done %s1084, 256
        $region60: #{tpu_custom_call.1} parent=55 // pred_fallthru
          _
      $region56: #{tpu_custom_call.1} parent=5 // pred_fallthru
        _
    $region6: #{tpu_custom_call.1} parent=1 // loop_footer
      %s21 = sadd.s32 1, %s17
    $region7: #{tpu_custom_call.1} parent=1 // loop_footer_branch
      %16 = sbr.rel target = $region3
    $region8: #{tpu_custom_call.1} parent=1 // loop_exit
      _
    %1090 = vsyncpa [#allocation3], 1
    %s1091 = scalar_lea.sflag [#allocation3], 1
    %1092 = vsyncpa %s1091, 1
    %1093 = vsyncpa [#allocation6], 1
    %1094 = vsyncpa [#allocation4], 1
    %s1095 = scalar_lea.sflag [#allocation4], 1
    %1096 = vsyncpa %s1095, 1

</llo_original>
